<compile_context>
chip_gen: v6e
topology: v6e:2x2x1
jax: 0.10.0
libtpu: 0.0.40
codegen_flags: <defaults>
</compile_context>

<pallas_src>
import functools

import numpy as np

import jax
import jax.numpy as jnp
from jax import lax
from jax.experimental import pallas as pl
from jax.experimental.pallas import tpu as pltpu


_UNROLL_MAX_CLASSES = 32


def _label_encode_kernel(classes_ref, x_ref, o_ref, *, num_classes, skip_class0):
    """First-match index of one (block_rows, lane) input tile vs the class table.

      out = 0
      for c = C-1 .. (1 if classes unique else 0):
          out = where(x == classes[c], c, out)

    Unmatched elements keep 0 (== torch.argmax of an all-zero row).
    """
    cmp_dtype = jnp.promote_types(x_ref.dtype, classes_ref.dtype)
    # Single in-kernel widen (VPU); HBM read stays at the input's native width.
    xv = x_ref[...].astype(cmp_dtype)
    out = jnp.zeros(xv.shape, jnp.int32)

    if num_classes <= _UNROLL_MAX_CLASSES:
        lowest = 1 if skip_class0 else 0
        # Hoist the SMEM scalar reads / splats out of the where-chain.
        cls = {c: classes_ref[c].astype(cmp_dtype)
               for c in range(lowest, num_classes)}
        for c in range(num_classes - 1, lowest - 1, -1):
            out = jnp.where(xv == cls[c], jnp.int32(c), out)
    else:
        # Linear scan with a rolled loop for big class tables.
        def body(i, acc):
            c = jnp.int32(num_classes - 1) - i
            cv = classes_ref[c].astype(cmp_dtype)
            return jnp.where(xv == cv, c, acc)
        out = lax.fori_loop(0, num_classes, body, out)

    o_ref[...] = out


def _first_match_ref(x_flat, classes_i32):
    """Plain-JAX first-match (mirrors the torch eq -> argmax exactly).

    Used both as the tail path (< lane leftover elements) and as the
    correctness reference in __main__.
    """
    cmp_dtype = jnp.promote_types(x_flat.dtype, classes_i32.dtype)
    eq = x_flat.astype(cmp_dtype)[:, None] == classes_i32.astype(cmp_dtype)[None, :]
    return jnp.argmax(eq.astype(jnp.int32), axis=1).astype(jnp.int32)


def numeric_label_encode(x, classes, *, block_rows=512, lane=1024):
    """JAX/Pallas equivalent of NumericLabelEncoder.forward.

    x:       any shape (labels, integer or float dtype; streamed natively)
    classes: (C,) class table (stored as int32, like torch.IntTensor(classes))
    returns: (x.size,) int32 index of the first matching class (0 if none)
    """
    classes = jnp.asarray(classes)
    classes_i32 = classes.astype(jnp.int32)          # SMEM scalar-prefetch table
    num_classes = int(classes_i32.shape[0])

    # Skip the c == 0 chain step iff the table is statically known unique
    # (reverse order + all steps is what preserves first-match semantics under
    # duplicates, so only skip when we can prove uniqueness).
    try:
        cls_np = np.asarray(jax.device_get(classes_i32))
        skip_class0 = int(np.unique(cls_np).size) == num_classes
    except Exception:                                # traced classes: keep all steps
        skip_class0 = False

    x_flat = jnp.ravel(x)
    n = x_flat.shape[0]
    if n == 0:
        return jnp.zeros((0,), jnp.int32)

    rows = n // lane
    n_main = rows * lane
    tail = n - n_main

    pieces = []
    if rows > 0:
        # No slice copy when n is lane-aligned (the common case).
        x_main = x_flat if tail == 0 else x_flat[:n_main]
        x_2d = x_main.reshape(rows, lane)

        # br == rows (legal: equals the full array dim) or a multiple of 8/16/32;
        # pl.cdiv grid lets Pallas mask the partial last row-block (no padding).
        br = min(block_rows, rows)
        grid = (pl.cdiv(rows, br),)

        kernel = functools.partial(
            _label_encode_kernel,
            num_classes=num_classes,
            skip_class0=skip_class0,
        )

        out_2d = pl.pallas_call(
            kernel,
            out_shape=jax.ShapeDtypeStruct((rows, lane), jnp.int32),
            grid_spec=pltpu.PrefetchScalarGridSpec(
                # Class table goes to SMEM once, read as scalars in the kernel.
                num_scalar_prefetch=1,
                grid=grid,
                in_specs=[pl.BlockSpec((br, lane), lambda i, cls: (i, 0))],
                out_specs=pl.BlockSpec((br, lane), lambda i, cls: (i, 0)),
            ),
            compiler_params=pltpu.CompilerParams(
                dimension_semantics=(pltpu.PARALLEL,)),
        )(classes_i32, x_2d)
        pieces.append(out_2d.reshape(n_main))

    if tail > 0:
        # Sub-lane tail (< 1024 elements): trivial in plain JAX.
        pieces.append(_first_match_ref(x_flat[n_main:], classes_i32))

    return pieces[0] if len(pieces) == 1 else jnp.concatenate(pieces)


if __name__ == "__main__":
    key = jax.random.PRNGKey(0)

    # Deterministic "parameter": the class table (torch.IntTensor(classes)).
    classes = jnp.array([0, 3, 5, 7, 11, 13, 2], dtype=jnp.int32)  # C = 7, unique

    # Example input: (2, 4, 16, 16) integer labels, mostly drawn from the
    # class table plus ~10% out-of-vocabulary values (which must map to 0).
    x_shape = (2, 4, 16, 16)
    k1, k2 = jax.random.split(key, 2)
    idx = jax.random.randint(k1, x_shape, 0, classes.shape[0])
    x = classes[idx]
    oov_mask = jax.random.bernoulli(k2, 0.1, x_shape)
    x = jnp.where(oov_mask, jnp.int32(999), x)      # 999 is not in classes

    out = jax.block_until_ready(numeric_label_encode(x, classes))

    # Reference check (plain JAX, mirrors the torch code exactly).
    ref = _first_match_ref(jnp.ravel(x), classes.astype(jnp.int32))
    assert out.shape == ref.shape
    assert bool(jnp.all(out == ref))

    print("KERNEL_OK")
</pallas_src>

<mosaic_0001>
module attributes {stable_mosaic.version = 11 : i64} {
  func.func @_label_encode_kernel(%arg0: i32, %arg1: memref<7xi32, #tpu.memory_space<smem>>, %arg2: memref<2x1024xi32, #tpu.memory_space<vmem>>, %arg3: memref<2x1024xi32, #tpu.memory_space<vmem>>) attributes {dimension_semantics = [#tpu.dimension_semantics<parallel>], iteration_bounds = array<i64: 1>, scalar_prefetch = 1 : i64, scratch_operands = 0 : i64, tpu.core_type = #tpu.core_type<tc>, window_params = [{transform_indices = @transform_0, window_bounds = array<i64: 2, 1024>}, {transform_indices = @transform_1, window_bounds = array<i64: 2, 1024>}]} {
    %c0 = arith.constant 0 : index
    %c0_0 = arith.constant 0 : index
    %0 = vector.load %arg2[%c0, %c0_0] : memref<2x1024xi32, #tpu.memory_space<vmem>>, vector<2x1024xi32>
    %c0_i32 = arith.constant 0 : i32
    %1 = vector.broadcast %c0_i32 : i32 to vector<2x1024xi32>
    %c1 = arith.constant 1 : index
    %2 = memref.load %arg1[%c1] : memref<7xi32, #tpu.memory_space<smem>>
    %c2 = arith.constant 2 : index
    %3 = memref.load %arg1[%c2] : memref<7xi32, #tpu.memory_space<smem>>
    %c3 = arith.constant 3 : index
    %4 = memref.load %arg1[%c3] : memref<7xi32, #tpu.memory_space<smem>>
    %c4 = arith.constant 4 : index
    %5 = memref.load %arg1[%c4] : memref<7xi32, #tpu.memory_space<smem>>
    %c5 = arith.constant 5 : index
    %6 = memref.load %arg1[%c5] : memref<7xi32, #tpu.memory_space<smem>>
    %c6 = arith.constant 6 : index
    %7 = memref.load %arg1[%c6] : memref<7xi32, #tpu.memory_space<smem>>
    %8 = vector.broadcast %7 : i32 to vector<2x1024xi32>
    %9 = arith.cmpi eq, %0, %8 : vector<2x1024xi32>
    %c6_i32 = arith.constant 6 : i32
    %10 = vector.broadcast %c6_i32 : i32 to vector<2x1024xi32>
    %11 = arith.select %9, %10, %1 : vector<2x1024xi1>, vector<2x1024xi32>
    %12 = vector.broadcast %6 : i32 to vector<2x1024xi32>
    %13 = arith.cmpi eq, %0, %12 : vector<2x1024xi32>
    %c5_i32 = arith.constant 5 : i32
    %14 = vector.broadcast %c5_i32 : i32 to vector<2x1024xi32>
    %15 = arith.select %13, %14, %11 : vector<2x1024xi1>, vector<2x1024xi32>
    %16 = vector.broadcast %5 : i32 to vector<2x1024xi32>
    %17 = arith.cmpi eq, %0, %16 : vector<2x1024xi32>
    %c4_i32 = arith.constant 4 : i32
    %18 = vector.broadcast %c4_i32 : i32 to vector<2x1024xi32>
    %19 = arith.select %17, %18, %15 : vector<2x1024xi1>, vector<2x1024xi32>
    %20 = vector.broadcast %4 : i32 to vector<2x1024xi32>
    %21 = arith.cmpi eq, %0, %20 : vector<2x1024xi32>
    %c3_i32 = arith.constant 3 : i32
    %22 = vector.broadcast %c3_i32 : i32 to vector<2x1024xi32>
    %23 = arith.select %21, %22, %19 : vector<2x1024xi1>, vector<2x1024xi32>
    %24 = vector.broadcast %3 : i32 to vector<2x1024xi32>
    %25 = arith.cmpi eq, %0, %24 : vector<2x1024xi32>
    %c2_i32 = arith.constant 2 : i32
    %26 = vector.broadcast %c2_i32 : i32 to vector<2x1024xi32>
    %27 = arith.select %25, %26, %23 : vector<2x1024xi1>, vector<2x1024xi32>
    %28 = vector.broadcast %2 : i32 to vector<2x1024xi32>
    %29 = arith.cmpi eq, %0, %28 : vector<2x1024xi32>
    %c1_i32 = arith.constant 1 : i32
    %30 = vector.broadcast %c1_i32 : i32 to vector<2x1024xi32>
    %31 = arith.select %29, %30, %27 : vector<2x1024xi1>, vector<2x1024xi32>
    %c0_1 = arith.constant 0 : index
    %c0_2 = arith.constant 0 : index
    %32 = vector.load %arg3[%c0_1, %c0_2] : memref<2x1024xi32, #tpu.memory_space<vmem>>, vector<2x1024xi32>
    tpu.vector_store %arg3[%c0_1, %c0_2], %31 {strides = array<i32>} : memref<2x1024xi32, #tpu.memory_space<vmem>>, vector<2x1024xi32>,
    return
  }
  func.func @transform_0(%arg0: i32, %arg1: memref<7xi32, #tpu.memory_space<smem>>) -> (i32, i32) {
    %c0_i32 = arith.constant 0 : i32
    %c0_i32_0 = arith.constant 0 : i32
    return %arg0, %c0_i32 : i32, i32
  }
  func.func @transform_1(%arg0: i32, %arg1: memref<7xi32, #tpu.memory_space<smem>>) -> (i32, i32) {
    %c0_i32 = arith.constant 0 : i32
    %c0_i32_0 = arith.constant 0 : i32
    return %arg0, %c0_i32 : i32, i32
  }
}

</mosaic_0001>

<llo_original>
// kernel: tpu_custom_call.1
$region0: #{tpu_custom_call.1}
  #allocation0 [shape = 'u32[]', space=smem, size = 0x4, offset = 0x4, fixed_abs, tag = 'smem constant byte address 0x4 - core index']
  #allocation1 [shape = 'u32[144,128]{1,0:T(1,128)}', space=vmem, size = 0x12000, scoped, tag = 'internal scratch']
  #allocation2 [shape = 's32[1]{0}', space=sflag, size = 0x4, scoped, tag = 'scoped memory for tpu_custom_call.1']
  #allocation3 [shape = 'u8[512]{0}', space=smem, size = 0x200, scoped, tag = 'prefetched SMEM operand 0']
  %s0 = inlined_call_operand.hbm [shape: s32[7], index: 0, kind: input, shape index: {}]
  %s1 = inlined_call_operand.hbm [shape: s32[2,1024], index: 1, kind: input, shape index: {}]
  %s2 = inlined_call_operand.hbm [shape: s32[2,1024], index: 2, kind: output, shape index: {}]
  %s3 = sld [smem:[#allocation0]]
  $region18: #{tpu_custom_call.1} parent=0
    _
  %s5 = ssub.s32 1, %s3
  %s6 = scalar_select 0, %s5, %s3
  %8 = dma.hbm_to_smem %s0, 16, [#allocation3], [#allocation2]
  %9 = dma.done [#allocation2], 16
  %10 = sfence
  $region1: #{tpu_custom_call.1} parent=0
    #allocation4 [shape = 'u8[8192]{0}', space=vmem, size = 0x2000, scoped, tag = 'input window, operand 1, single buffered']
    #allocation5 [shape = 's32[1]{0}', space=sflag, size = 0x4, scoped, tag = 'scoped memory for tpu_custom_call.1']
    #allocation6 [shape = 's32[1]{0}', space=sflag, size = 0x4, scoped, tag = 'scoped memory for tpu_custom_call.1']
    #allocation7 [shape = 'u8[8192]{0}', space=vmem, size = 0x2000, scoped, tag = 'output window, operand 0, single buffered']
    %11 = vsyncpa [#allocation5], 0
    %12 = vsyncpa [#allocation6], 0
    // Predicated region
    $region2: #{tpu_custom_call.1} parent=1 // pred_check
      _
    $region3: #{tpu_custom_call.1} parent=1 // pred_check_branch
      %14 = sbr.rel (0) target = $region5
    $region4: #{tpu_custom_call.1} parent=1 // pred_region
      %s16 = ssub.s32 256, 256
      %17 = vsyncadd [#allocation5], %s16
      %s19 = sshll.u32 [#allocation4], 4
      %s20 = int_to_ptr.vmem [resolvable:$true] %s19
      %22 = dma.hbm_to_vmem [thread:$0]  %s1, 256, %s20, [#allocation5]
    $region5: #{tpu_custom_call.1} parent=1 // pred_fallthru
      _
    // Predicated region
    $region6: #{tpu_custom_call.1} parent=1 // pred_check
      _
    $region7: #{tpu_custom_call.1} parent=1 // pred_check_branch
      %24 = sbr.rel (0) target = $region9
    $region8: #{tpu_custom_call.1} parent=1 // pred_region
      %25 = dma.done [#allocation5], 256
    $region9: #{tpu_custom_call.1} parent=1 // pred_fallthru
      _
    %v26 = vld [vmem:[#allocation4] sm:$0xff]
    %v27 = vld [vmem:[#allocation4 + $0x8] sm:$0xff]
    %s28 = sld [smem:[#allocation3 + $0x1]]
    %s29 = sld [smem:[#allocation3 + $0x2]]
    %s30 = sld [smem:[#allocation3 + $0x3]]
    %s31 = sld [smem:[#allocation3 + $0x4]]
    %s32 = sld [smem:[#allocation3 + $0x5]]
    %s33 = sld [smem:[#allocation3 + $0x6]]
    %v34 = vstv %s33
    %vm35 = vcmp.eq.s32.totalorder %v26, %v34
    %vm36 = vcmp.eq.s32.totalorder %v27, %v34
    %v37 = vsel %vm35, 6, 0
    %v38 = vsel %vm36, 6, 0
    %v39 = vstv %s32
    %vm40 = vcmp.eq.s32.totalorder %v26, %v39
    %vm41 = vcmp.eq.s32.totalorder %v27, %v39
    %v42 = vsel %vm40, 5, %v37
    %v43 = vsel %vm41, 5, %v38
    %v44 = vstv %s31
    %vm45 = vcmp.eq.s32.totalorder %v26, %v44
    %vm46 = vcmp.eq.s32.totalorder %v27, %v44
    %v47 = vsel %vm45, 4, %v42
    %v48 = vsel %vm46, 4, %v43
    %v49 = vstv %s30
    %vm50 = vcmp.eq.s32.totalorder %v26, %v49
    %vm51 = vcmp.eq.s32.totalorder %v27, %v49
    %v52 = vsel %vm50, 3, %v47
    %v53 = vsel %vm51, 3, %v48
    %v54 = vstv %s29
    %vm55 = vcmp.eq.s32.totalorder %v26, %v54
    %vm56 = vcmp.eq.s32.totalorder %v27, %v54
    %v57 = vsel %vm55, 2, %v52
    %v58 = vsel %vm56, 2, %v53
    %v59 = vstv %s28
    %vm60 = vcmp.eq.s32.totalorder %v26, %v59
    %vm61 = vcmp.eq.s32.totalorder %v27, %v59
    %v62 = vsel %vm60, 1, %v57
    %v63 = vsel %vm61, 1, %v58
    %64 = vst [vmem:[#allocation7] sm:$0xff] %v62
    %65 = vst [vmem:[#allocation7 + $0x8] sm:$0xff] %v63
    // Predicated region
    $region10: #{tpu_custom_call.1} parent=1 // pred_check
      _
    $region11: #{tpu_custom_call.1} parent=1 // pred_check_branch
      %67 = sbr.rel (0) target = $region13
    $region12: #{tpu_custom_call.1} parent=1 // pred_region
      %s69 = ssub.s32 256, 256
      %70 = vsyncadd [#allocation6], %s69
      %s72 = sshll.u32 [#allocation7], 4
      %s73 = int_to_ptr.vmem [resolvable:$true] %s72
      %75 = dma.vmem_to_hbm [thread:$0]  %s73, 256, %s2, [#allocation6]
    $region13: #{tpu_custom_call.1} parent=1 // pred_fallthru
      _
    // Predicated region
    $region14: #{tpu_custom_call.1} parent=1 // pred_check
      _
    $region15: #{tpu_custom_call.1} parent=1 // pred_check_branch
      %77 = sbr.rel (0) target = $region17
    $region16: #{tpu_custom_call.1} parent=1 // pred_region
      %78 = dma.done [#allocation6], 256
    $region17: #{tpu_custom_call.1} parent=1 // pred_fallthru
      _
    %79 = vsyncpa [#allocation5], 1
    %80 = vsyncpa [#allocation6], 1

</llo_original>
